<compile_context>
chip_gen: v6e
topology: v6e:2x2x1
jax: 0.10.0
libtpu: 0.0.40
codegen_flags: <defaults>
</compile_context>

<pallas_src>
import functools

import jax
import jax.numpy as jnp
from jax.experimental import pallas as pl
from jax.experimental.pallas import tpu as pltpu

# Leading "parallel" grid axis: lets v7x's 2 TensorCores each take half the
# batch tiles. On single-core v5e/v6e it is just a serial outer loop (no cost).
_NSPLIT = 2


def _round_up(x, m):
    return ((x + m - 1) // m) * m


def _cdiv(a, b):
    return (a + b - 1) // b


def _jsd_kernel(lp_ref, lq_ref, out_ref, *, true_b, tile_b, steps):
    c = pl.program_id(0)            # core-split index ("parallel")
    i = pl.program_id(1)            # reduction over batch tiles ("arbitrary")

    # Zero this core-split's resident partial-sum block on its first step.
    @pl.when(i == 0)
    def _():
        out_ref[...] = jnp.zeros_like(out_ref)

    lp = lp_ref[...].astype(jnp.float32)   # (tile_b, C)
    lq = lq_ref[...].astype(jnp.float32)   # (tile_b, C)
    n_cls = lp.shape[-1]

    # Logical (unclamped) global row index of each row in this block. Rows with
    # index >= true_b are either ragged-tail garbage of the last real block or
    # the duplicate data of a clamped redundant block -> masked out.
    row = (c * steps + i) * tile_b + jax.lax.broadcasted_iota(
        jnp.int32, (tile_b, 1), 0)
    valid = row < true_b

    # Sanitise garbage rows so no NaN/Inf ever enters the arithmetic (rowwise
    # ops would otherwise keep it contained, but this is ~free insurance).
    lp = jnp.where(valid, lp, 0.0)
    lq = jnp.where(valid, lq, 0.0)

    def softmax_last(x):
        x = x - jnp.max(x, axis=-1, keepdims=True)
        e = jnp.exp(x)
        return e * pl.reciprocal(jnp.sum(e, axis=-1, keepdims=True), approx=False)

    def logsumexp_probs(x):
        # x in [0, 1]: exp(x) in [1, e], no overflow -> skip the max shift.
        return jnp.log(jnp.sum(jnp.exp(x), axis=-1, keepdims=True))

    p = softmax_last(lp)
    q = softmax_last(lq)
    m = 0.5 * (p + q)

    # NOTE: matches the PyTorch module exactly — log_softmax of the *softmaxed*
    # probabilities. Folded form:
    #   log_softmax(p)_j = p_j - logsumexp(p)
    #   m_j*(log_softmax(p)_j + log_softmax(q)_j) = m_j*(p_j + q_j) - m_j*cst
    #                                             = 2*m_j^2 - m_j*cst
    # with cst = logsumexp(p) + logsumexp(q) per row.
    cst = logsumexp_probs(p) + logsumexp_probs(q)            # (tile_b, 1)

    # xlogy(m, m) with the F.kl_div convention 0*log(0) := 0.
    xlogm = jnp.where(m > 0.0, m * jnp.log(jnp.where(m > 0.0, m, 1.0)), 0.0)
    contrib = 2.0 * xlogm - 2.0 * (m * m) + m * cst          # (tile_b, C)
    contrib = jnp.where(valid, contrib, 0.0)

    # Lane/sublane-parallel partial sums: pure VALU adds each step; the single
    # cross-lane/cross-sublane reduce is deferred to the JAX wrapper.
    out_ref[...] += jnp.sum(contrib.reshape(tile_b // 8, 8, n_cls), axis=0)


def js_divergence(logits_p, logits_q, *, tile_b=None):
    assert logits_p.shape == logits_q.shape and logits_p.ndim == 2
    B, C = logits_p.shape

    # Size the batch tile so one f32 input block is ~1 MiB (per-step overhead
    # well amortised; intermediates comfortably inside a 32 MiB VMEM budget on
    # all of v5e / v6e / v7x). Multiple of 8, clamped to [8, 2048] and batch.
    if tile_b is None:
        tile_b = (1 << 20) // (4 * C) // 8 * 8
        tile_b = max(8, min(2048, tile_b))
    tile_b = max(8, (int(tile_b) // 8) * 8)
    tile_b = min(tile_b, _round_up(B, 8))

    num_blocks = _cdiv(B, tile_b)
    steps = _cdiv(num_blocks, _NSPLIT)

    kernel = functools.partial(_jsd_kernel, true_b=B, tile_b=tile_b, steps=steps)

    def in_map(c, i):
        # Clamp so every DMA reads a fully in-bounds block index; redundant
        # (clamped) steps are zeroed in-kernel by the logical row mask.
        return (jnp.minimum(c * steps + i, num_blocks - 1), 0)

    in_spec = pl.BlockSpec((tile_b, C), in_map)

    out = pl.pallas_call(
        kernel,
        out_shape=jax.ShapeDtypeStruct((_NSPLIT * 8, C), jnp.float32),
        grid_spec=pltpu.PrefetchScalarGridSpec(
            num_scalar_prefetch=0,
            grid=(_NSPLIT, steps),
            in_specs=[in_spec, in_spec],
            out_specs=pl.BlockSpec((8, C), lambda c, i: (c, 0)),
        ),
        compiler_params=pltpu.CompilerParams(
            dimension_semantics=("parallel", "arbitrary"),
            vmem_limit_bytes=32 * 1024 * 1024,
        ),
    )(logits_p, logits_q)

    # Final tiny cross-lane reduce + batchmean + /2 (true B).
    return jnp.sum(out) * (0.5 / B)


def js_divergence_ref(logits_p, logits_q):
    """Pure-JAX reference mirroring the PyTorch module (including its quirk)."""
    p = jax.nn.softmax(logits_p.astype(jnp.float32), axis=1)
    q = jax.nn.softmax(logits_q.astype(jnp.float32), axis=1)
    m = (p + q) / 2.0
    lsp = jax.nn.log_softmax(p, axis=1)
    lsq = jax.nn.log_softmax(q, axis=1)
    B = logits_p.shape[0]
    xlogy = jnp.where(m > 0, m * jnp.log(jnp.where(m > 0, m, 1.0)), 0.0)
    kl_p = jnp.sum(xlogy - m * lsp) / B
    kl_q = jnp.sum(xlogy - m * lsq) / B
    return (kl_p + kl_q) / 2.0


if __name__ == "__main__":
    key = jax.random.PRNGKey(0)
    k1, k2, k3, k4, k5, k6 = jax.random.split(key, 6)

    # Case 1: small aligned shape, default tile selection (single block).
    B1, C1 = 16, 128
    lp1 = jax.random.normal(k1, (B1, C1), dtype=jnp.float32)
    lq1 = jax.random.normal(k2, (B1, C1), dtype=jnp.float32)
    got1 = jax.block_until_ready(js_divergence(lp1, lq1))
    ref1 = jax.block_until_ready(js_divergence_ref(lp1, lq1))
    assert jnp.isfinite(got1), "kernel produced non-finite output"
    assert abs(float(got1) - float(ref1)) < 1e-5, (float(got1), float(ref1))

    # Case 2: ragged batch + small tile to force multi-step accumulation,
    # a ragged final block (no host-side padding) and a clamped redundant step.
    B2, C2 = 40, 128
    lp2 = jax.random.normal(k3, (B2, C2), dtype=jnp.float32)
    lq2 = jax.random.normal(k4, (B2, C2), dtype=jnp.float32)
    got2 = jax.block_until_ready(js_divergence(lp2, lq2, tile_b=16))
    ref2 = jax.block_until_ready(js_divergence_ref(lp2, lq2))
    assert jnp.isfinite(got2), "kernel produced non-finite output"
    assert abs(float(got2) - float(ref2)) < 1e-5, (float(got2), float(ref2))

    # Case 3: bf16 inputs pass through unchanged (cast to f32 in-kernel).
    B3, C3 = 24, 256
    lp3 = jax.random.normal(k5, (B3, C3), dtype=jnp.bfloat16)
    lq3 = jax.random.normal(k6, (B3, C3), dtype=jnp.bfloat16)
    got3 = jax.block_until_ready(js_divergence(lp3, lq3, tile_b=8))
    ref3 = jax.block_until_ready(js_divergence_ref(lp3, lq3))
    assert jnp.isfinite(got3), "kernel produced non-finite output"
    assert abs(float(got3) - float(ref3)) < 1e-4, (float(got3), float(ref3))

    print("KERNEL_OK")
</pallas_src>

<mosaic_0001>
module attributes {stable_mosaic.version = 11 : i64} {
  func.func @_jsd_kernel(%arg0: i32, %arg1: i32, %arg2: memref<16x128xf32, #tpu.memory_space<vmem>>, %arg3: memref<16x128xf32, #tpu.memory_space<vmem>>, %arg4: memref<8x128xf32, #tpu.memory_space<vmem>>) attributes {dimension_semantics = [#tpu.dimension_semantics<parallel>, #tpu.dimension_semantics<arbitrary>], iteration_bounds = array<i64: 2, 1>, scalar_prefetch = 0 : i64, scratch_operands = 0 : i64, tpu.core_type = #tpu.core_type<tc>, window_params = [{transform_indices = @transform_0, window_bounds = array<i64: 16, 128>}, {transform_indices = @transform_1, window_bounds = array<i64: 16, 128>}, {transform_indices = @transform_2, window_bounds = array<i64: 8, 128>}]} {
    %c0_i32 = arith.constant 0 : i32
    %0 = arith.cmpi eq, %arg1, %c0_i32 : i32
    %1 = arith.extui %0 : i1 to i32
    %c0_i32_0 = arith.constant 0 : i32
    %2 = arith.cmpi ne, %1, %c0_i32_0 : i32
    scf.if %2 {
      %cst_25 = arith.constant 0.000000e+00 : f32
      %81 = vector.broadcast %cst_25 : f32 to vector<8x128xf32>
      %c0_26 = arith.constant 0 : index
      %c0_27 = arith.constant 0 : index
      %82 = vector.load %arg4[%c0_26, %c0_27] : memref<8x128xf32, #tpu.memory_space<vmem>>, vector<8x128xf32>
      tpu.vector_store %arg4[%c0_26, %c0_27], %81 {strides = array<i32>} : memref<8x128xf32, #tpu.memory_space<vmem>>, vector<8x128xf32>,
    } else {
    }
    %c0 = arith.constant 0 : index
    %c0_1 = arith.constant 0 : index
    %3 = vector.load %arg2[%c0, %c0_1] : memref<16x128xf32, #tpu.memory_space<vmem>>, vector<16x128xf32>
    %c0_2 = arith.constant 0 : index
    %c0_3 = arith.constant 0 : index
    %4 = vector.load %arg3[%c0_2, %c0_3] : memref<16x128xf32, #tpu.memory_space<vmem>>, vector<16x128xf32>
    %c1_i32 = arith.constant 1 : i32
    %5 = arith.muli %arg0, %c1_i32 : i32
    %6 = arith.addi %5, %arg1 : i32
    %c16_i32 = arith.constant 16 : i32
    %7 = arith.muli %6, %c16_i32 : i32
    %8 = tpu.iota {dimensions = array<i32: 0>} : vector<16x1xi32>
    %9 = vector.broadcast %7 : i32 to vector<16x1xi32>
    %10 = arith.addi %9, %8 : vector<16x1xi32>
    %c16_i32_4 = arith.constant 16 : i32
    %11 = vector.broadcast %c16_i32_4 : i32 to vector<16x1xi32>
    %12 = arith.cmpi slt, %10, %11 : vector<16x1xi32>
    %cst = arith.constant 0.000000e+00 : f32
    %13 = vector.shape_cast %12 : vector<16x1xi1> to vector<16x1xi1>
    %14 = vector.broadcast %13 : vector<16x1xi1> to vector<16x128xi1>
    %15 = vector.broadcast %cst : f32 to vector<16x128xf32>
    %16 = arith.select %14, %3, %15 : vector<16x128xi1>, vector<16x128xf32>
    %cst_5 = arith.constant 0.000000e+00 : f32
    %17 = vector.shape_cast %12 : vector<16x1xi1> to vector<16x1xi1>
    %18 = vector.broadcast %17 : vector<16x1xi1> to vector<16x128xi1>
    %19 = vector.broadcast %cst_5 : f32 to vector<16x128xf32>
    %20 = arith.select %18, %4, %19 : vector<16x128xi1>, vector<16x128xf32>
    %cst_6 = arith.constant dense<0xFF800000> : vector<16xf32>
    %21 = vector.multi_reduction <maximumf>, %16, %cst_6 [1] : vector<16x128xf32> to vector<16xf32>
    %22 = vector.shape_cast %21 : vector<16xf32> to vector<16x1xf32>
    %23 = vector.broadcast %22 : vector<16x1xf32> to vector<16x128xf32>
    %24 = arith.subf %16, %23 : vector<16x128xf32>
    %25 = math.exp %24 : vector<16x128xf32>
    %cst_7 = arith.constant dense<0.000000e+00> : vector<16xf32>
    %26 = vector.multi_reduction <add>, %25, %cst_7 [1] : vector<16x128xf32> to vector<16xf32>
    %27 = vector.shape_cast %26 : vector<16xf32> to vector<16x1xf32>
    %28 = tpu.reciprocal %27 : vector<16x1xf32> -> vector<16x1xf32>
    %29 = vector.broadcast %28 : vector<16x1xf32> to vector<16x128xf32>
    %30 = arith.mulf %25, %29 : vector<16x128xf32>
    %cst_8 = arith.constant dense<0xFF800000> : vector<16xf32>
    %31 = vector.multi_reduction <maximumf>, %20, %cst_8 [1] : vector<16x128xf32> to vector<16xf32>
    %32 = vector.shape_cast %31 : vector<16xf32> to vector<16x1xf32>
    %33 = vector.broadcast %32 : vector<16x1xf32> to vector<16x128xf32>
    %34 = arith.subf %20, %33 : vector<16x128xf32>
    %35 = math.exp %34 : vector<16x128xf32>
    %cst_9 = arith.constant dense<0.000000e+00> : vector<16xf32>
    %36 = vector.multi_reduction <add>, %35, %cst_9 [1] : vector<16x128xf32> to vector<16xf32>
    %37 = vector.shape_cast %36 : vector<16xf32> to vector<16x1xf32>
    %38 = tpu.reciprocal %37 : vector<16x1xf32> -> vector<16x1xf32>
    %39 = vector.broadcast %38 : vector<16x1xf32> to vector<16x128xf32>
    %40 = arith.mulf %35, %39 : vector<16x128xf32>
    %41 = arith.addf %30, %40 : vector<16x128xf32>
    %cst_10 = arith.constant 5.000000e-01 : f32
    %42 = vector.broadcast %cst_10 : f32 to vector<16x128xf32>
    %43 = arith.mulf %42, %41 : vector<16x128xf32>
    %44 = math.exp %30 : vector<16x128xf32>
    %cst_11 = arith.constant dense<0.000000e+00> : vector<16xf32>
    %45 = vector.multi_reduction <add>, %44, %cst_11 [1] : vector<16x128xf32> to vector<16xf32>
    %46 = vector.shape_cast %45 : vector<16xf32> to vector<16x1xf32>
    %47 = math.log %46 : vector<16x1xf32>
    %48 = math.exp %40 : vector<16x128xf32>
    %cst_12 = arith.constant dense<0.000000e+00> : vector<16xf32>
    %49 = vector.multi_reduction <add>, %48, %cst_12 [1] : vector<16x128xf32> to vector<16xf32>
    %50 = vector.shape_cast %49 : vector<16xf32> to vector<16x1xf32>
    %51 = math.log %50 : vector<16x1xf32>
    %52 = arith.addf %47, %51 : vector<16x1xf32>
    %cst_13 = arith.constant 0.000000e+00 : f32
    %53 = vector.broadcast %cst_13 : f32 to vector<16x128xf32>
    %54 = arith.cmpf ogt, %43, %53 : vector<16x128xf32>
    %cst_14 = arith.constant 0.000000e+00 : f32
    %55 = vector.broadcast %cst_14 : f32 to vector<16x128xf32>
    %56 = arith.cmpf ogt, %43, %55 : vector<16x128xf32>
    %cst_15 = arith.constant 1.000000e+00 : f32
    %57 = vector.broadcast %cst_15 : f32 to vector<16x128xf32>
    %58 = arith.select %56, %43, %57 : vector<16x128xi1>, vector<16x128xf32>
    %59 = math.log %58 : vector<16x128xf32>
    %60 = arith.mulf %43, %59 : vector<16x128xf32>
    %cst_16 = arith.constant 0.000000e+00 : f32
    %61 = vector.broadcast %cst_16 : f32 to vector<16x128xf32>
    %62 = arith.select %54, %60, %61 : vector<16x128xi1>, vector<16x128xf32>
    %cst_17 = arith.constant 2.000000e+00 : f32
    %63 = vector.broadcast %cst_17 : f32 to vector<16x128xf32>
    %64 = arith.mulf %63, %62 : vector<16x128xf32>
    %65 = arith.mulf %43, %43 : vector<16x128xf32>
    %cst_18 = arith.constant 2.000000e+00 : f32
    %66 = vector.broadcast %cst_18 : f32 to vector<16x128xf32>
    %67 = arith.mulf %66, %65 : vector<16x128xf32>
    %68 = arith.subf %64, %67 : vector<16x128xf32>
    %69 = vector.broadcast %52 : vector<16x1xf32> to vector<16x128xf32>
    %70 = arith.mulf %43, %69 : vector<16x128xf32>
    %71 = arith.addf %68, %70 : vector<16x128xf32>
    %cst_19 = arith.constant 0.000000e+00 : f32
    %72 = vector.shape_cast %12 : vector<16x1xi1> to vector<16x1xi1>
    %73 = vector.broadcast %72 : vector<16x1xi1> to vector<16x128xi1>
    %74 = vector.broadcast %cst_19 : f32 to vector<16x128xf32>
    %75 = arith.select %73, %71, %74 : vector<16x128xi1>, vector<16x128xf32>
    %c0_20 = arith.constant 0 : index
    %c0_21 = arith.constant 0 : index
    %76 = vector.load %arg4[%c0_20, %c0_21] : memref<8x128xf32, #tpu.memory_space<vmem>>, vector<8x128xf32>
    %77 = vector.shape_cast %75 : vector<16x128xf32> to vector<2x8x128xf32>
    %cst_22 = arith.constant dense<0.000000e+00> : vector<8x128xf32>
    %78 = vector.multi_reduction <add>, %77, %cst_22 [0] : vector<2x8x128xf32> to vector<8x128xf32>
    %79 = arith.addf %76, %78 : vector<8x128xf32>
    %c0_23 = arith.constant 0 : index
    %c0_24 = arith.constant 0 : index
    %80 = vector.load %arg4[%c0_23, %c0_24] : memref<8x128xf32, #tpu.memory_space<vmem>>, vector<8x128xf32>
    tpu.vector_store %arg4[%c0_23, %c0_24], %79 {strides = array<i32>} : memref<8x128xf32, #tpu.memory_space<vmem>>, vector<8x128xf32>,
    return
  }
  func.func @transform_0(%arg0: i32, %arg1: i32) -> (i32, i32) {
    %c1_i32 = arith.constant 1 : i32
    %0 = arith.muli %arg0, %c1_i32 : i32
    %1 = arith.addi %0, %arg1 : i32
    %c0_i32 = arith.constant 0 : i32
    %2 = arith.minsi %1, %c0_i32 : i32
    %c0_i32_0 = arith.constant 0 : i32
    %c0_i32_1 = arith.constant 0 : i32
    return %2, %c0_i32_0 : i32, i32
  }
  func.func @transform_1(%arg0: i32, %arg1: i32) -> (i32, i32) {
    %c1_i32 = arith.constant 1 : i32
    %0 = arith.muli %arg0, %c1_i32 : i32
    %1 = arith.addi %0, %arg1 : i32
    %c0_i32 = arith.constant 0 : i32
    %2 = arith.minsi %1, %c0_i32 : i32
    %c0_i32_0 = arith.constant 0 : i32
    %c0_i32_1 = arith.constant 0 : i32
    return %2, %c0_i32_0 : i32, i32
  }
  func.func @transform_2(%arg0: i32, %arg1: i32) -> (i32, i32) {
    %c0_i32 = arith.constant 0 : i32
    %c0_i32_0 = arith.constant 0 : i32
    return %arg0, %c0_i32 : i32, i32
  }
}

</mosaic_0001>

<llo_original>
// kernel: tpu_custom_call.1
$region0: #{tpu_custom_call.1}
  #allocation0 [shape = 'u32[]', space=smem, size = 0x4, offset = 0x4, fixed_abs, tag = 'smem constant byte address 0x4 - core index']
  #allocation1 [shape = 'u32[144,128]{1,0:T(1,128)}', space=vmem, size = 0x12000, scoped, tag = 'internal scratch']
  %s0 = inlined_call_operand.hbm [shape: f32[16,128], index: 0, kind: input, shape index: {}]
  %s1 = inlined_call_operand.hbm [shape: f32[16,128], index: 1, kind: input, shape index: {}]
  %s2 = inlined_call_operand.hbm [shape: f32[16,128], index: 2, kind: output, shape index: {}]
  %s3 = sld [smem:[#allocation0]]
  $region53: #{tpu_custom_call.1} parent=0
    _
  %s5 = ssub.s32 1, %s3
  %s6 = scalar_select 0, %s5, %s3
  $region1: #{tpu_custom_call.1} parent=0
    #allocation2 [shape = 'u8[16384]{0}', space=vmem, size = 0x4000, scoped, tag = 'input window, operand 0']
    #allocation3 [shape = 's32[2]{0}', space=sflag, size = 0x8, scoped, tag = 'scoped memory for tpu_custom_call.1']
    #allocation4 [shape = 's32[2]{0}', space=sflag, size = 0x8, scoped, tag = 'scoped memory for tpu_custom_call.1']
    #allocation5 [shape = 'u8[16384]{0}', space=vmem, size = 0x4000, scoped, tag = 'input window, operand 1']
    #allocation6 [shape = 's32[2]{0}', space=sflag, size = 0x8, scoped, tag = 'scoped memory for tpu_custom_call.1']
    #allocation7 [shape = 'u8[8192]{0}', space=vmem, size = 0x2000, scoped, tag = 'output window, operand 0']
    %7 = vsyncpa [#allocation3], 0
    %s8 = scalar_lea.sflag [#allocation3], 1
    %9 = vsyncpa %s8, 0
    %10 = vsyncpa [#allocation6], 0
    %s11 = scalar_lea.sflag [#allocation6], 1
    %12 = vsyncpa %s11, 0
    %13 = vsyncpa [#allocation4], 0
    %s14 = scalar_lea.sflag [#allocation4], 1
    %15 = vsyncpa %s14, 0
    loop: start=0, step=1, limit=4
    $region2: #{tpu_custom_call.1} parent=1 // loop_pre_header
      _
    $region3: #{tpu_custom_call.1} parent=1 // loop_header
      %s17 = sphi 0, %s21
      %p18 = scmp.ge.s32.totalorder %s17, 4
      %s24 = sphi 0, %s36
      %s25 = sphi 0, %s32
      %s26 = sphi 0, %s24
      %s27 = sphi 0, %s25
      %s28 = sphi 0, %s26
      %s29 = sphi 0, %s27
      %s45 = sphi 0, %s47
      %s48 = sphi 0, %s45
      %s49 = sphi 0, %s48
      %s65 = sphi 0, %s49
      %s77 = sphi 0, %s79
      %s80 = sphi 0, %s77
      %s81 = sphi 0, %s80
      %s97 = sphi 0, %s81
      %s103 = sphi 0, %s105
      %s106 = sphi 0, %s103
      %s107 = sphi 0, %s106
      %s123 = sphi 0, %s107
    $region4: #{tpu_custom_call.1} parent=1 // loop_header_branch
      %20 = sbr.rel (%p18) target = $region8
    $region5: #{tpu_custom_call.1} parent=1 // loop_body
      %s22 = ssub.s32 %s17, 1
      %s23 = ssub.s32 %s17, 2
      %s30 = sadd.s32 1, %s25
      %p31 = scmp.ge.s32.totalorder %s30, 1
      %s32 = scalar_select %p31, 0, %s30
      %s33 = sadd.s32 1, %s24
      %s34 = scalar_select %p31, %s33, %s24
      %p35 = scmp.ge.s32.totalorder %s34, 2
      %s36 = scalar_select %p35, 0, %s34
      %s37 = sadd.s32 %s24, %s25
      %p38 = scmp.lt.s32.totalorder %s37, 0
      %s39 = scalar_select %p38, %s37, 0
      %s40 = sadd.s32 %s36, %s32
      %p41 = scmp.lt.s32.totalorder %s40, 0
      %s42 = scalar_select %p41, %s40, 0
      %s43 = ssub.s32 %s39, %s42
      %p44 = scmp.eq.s32.totalorder %s43, 0
      %s46 = sadd.s32 %s45, 1
      %s47 = scalar_select %p44, %s45, %s46
      %p50 = pneg %p44
      %p51 = scmp.eq.s32.totalorder %s17, 1
      %p52 = por %p50, %p51
      %p53 = scmp.ne.s32.totalorder %s45, %s48
      %p54 = scmp.eq.s32.totalorder %s17, 0
      %p55 = por %p53, %p54
      %p56 = scmp.ne.s32.totalorder %s45, %s48
      %p57 = scmp.eq.s32.totalorder %s22, 1
      %p58 = por %p56, %p57
      %p59 = scmp.ne.s32.totalorder %s48, %s49
      %p60 = scmp.eq.s32.totalorder %s22, 0
      %p61 = por %p59, %p60
      %p62 = scmp.ne.s32.totalorder %s48, %s49
      %p63 = scmp.eq.s32.totalorder %s23, 1
      %p64 = por %p62, %p63
      %p66 = scmp.ne.s32.totalorder %s49, %s65
      %p67 = scmp.eq.s32.totalorder %s23, 0
      %p68 = por %p66, %p67
      %s69 = sadd.s32 %s24, %s25
      %p70 = scmp.lt.s32.totalorder %s69, 0
      %s71 = scalar_select %p70, %s69, 0
      %s72 = sadd.s32 %s36, %s32
      %p73 = scmp.lt.s32.totalorder %s72, 0
      %s74 = scalar_select %p73, %s72, 0
      %s75 = ssub.s32 %s71, %s74
      %p76 = scmp.eq.s32.totalorder %s75, 0
      %s78 = sadd.s32 %s77, 1
      %s79 = scalar_select %p76, %s77, %s78
      %p82 = pneg %p76
      %p83 = scmp.eq.s32.totalorder %s17, 1
      %p84 = por %p82, %p83
      %p85 = scmp.ne.s32.totalorder %s77, %s80
      %p86 = scmp.eq.s32.totalorder %s17, 0
      %p87 = por %p85, %p86
      %p88 = scmp.ne.s32.totalorder %s77, %s80
      %p89 = scmp.eq.s32.totalorder %s22, 1
      %p90 = por %p88, %p89
      %p91 = scmp.ne.s32.totalorder %s80, %s81
      %p92 = scmp.eq.s32.totalorder %s22, 0
      %p93 = por %p91, %p92
      %p94 = scmp.ne.s32.totalorder %s80, %s81
      %p95 = scmp.eq.s32.totalorder %s23, 1
      %p96 = por %p94, %p95
      %p98 = scmp.ne.s32.totalorder %s81, %s97
      %p99 = scmp.eq.s32.totalorder %s23, 0
      %p100 = por %p98, %p99
      %s101 = ssub.s32 %s24, %s36
      %p102 = scmp.eq.s32.totalorder %s101, 0
      %s104 = sadd.s32 %s103, 1
      %s105 = scalar_select %p102, %s103, %s104
      %p108 = pneg %p102
      %p109 = scmp.eq.s32.totalorder %s17, 1
      %p110 = por %p108, %p109
      %p111 = scmp.ne.s32.totalorder %s103, %s106
      %p112 = scmp.eq.s32.totalorder %s17, 0
      %p113 = por %p111, %p112
      %p114 = scmp.ne.s32.totalorder %s103, %s106
      %p115 = scmp.eq.s32.totalorder %s22, 1
      %p116 = por %p114, %p115
      %p117 = scmp.ne.s32.totalorder %s106, %s107
      %p118 = scmp.eq.s32.totalorder %s22, 0
      %p119 = por %p117, %p118
      %p120 = scmp.ne.s32.totalorder %s106, %s107
      %p121 = scmp.eq.s32.totalorder %s23, 1
      %p122 = por %p120, %p121
      %p124 = scmp.ne.s32.totalorder %s107, %s123
      %p125 = scmp.eq.s32.totalorder %s23, 0
      %p126 = por %p124, %p125
      %p127 = scmp.le.s32.totalorder 1, %s17
      %p128 = scmp.lt.s32.totalorder %s17, 3
      %p129 = pnand %p127, %p128
      %p130 = pneg %p129
      // Predicated region
      $region9: #{tpu_custom_call.1} parent=5 // pred_check
        _
      $region10: #{tpu_custom_call.1} parent=5 // pred_check_branch
        %132 = sbr.rel (%p129) target = $region12
      $region11: #{tpu_custom_call.1} parent=5 // pred_region
        %s133 = ssub.s32 %s17, 1
      $region12: #{tpu_custom_call.1} parent=5 // pred_fallthru
        _
      %p134 = scmp.lt.s32.totalorder %s17, 2
      // Predicated region
      $region13: #{tpu_custom_call.1} parent=5 // pred_check
        %p135 = pneg %p134
      $region14: #{tpu_custom_call.1} parent=5 // pred_check_branch
        %137 = sbr.rel (%p135) target = $region16
      $region15: #{tpu_custom_call.1} parent=5 // pred_region
        // Predicated region
        $region17: #{tpu_custom_call.1} parent=15 // pred_check
          %p138 = pneg %p55
        $region18: #{tpu_custom_call.1} parent=15 // pred_check_branch
          %140 = sbr.rel (%p138) target = $region20
        $region19: #{tpu_custom_call.1} parent=15 // pred_region
          %s141 = sand.u32 %s45, 1
          %s142 = scalar_lea.sflag [#allocation3], %s141
          %s143 = sand.u32 %s45, 1
          %s144 = smul.addr %s143, 16
          %s145 = scalar_lea.vmem [#allocation2], %s144
          %s146 = sadd.s32 %s24, %s25
          %p147 = scmp.lt.s32.totalorder %s146, 0
          %s148 = scalar_select %p147, %s146, 0
          %s149 = smul.u32 2, %s148
          %s151 = ssub.s32 256, 256
          %152 = vsyncadd %s142, %s151
          %s153 = smul.addr %s149, 128
          %s154 = scalar_lea.hbm %s0, %s153
          %s155 = sshll.u32 %s145, 4
          %s156 = int_to_ptr.vmem [resolvable:$true] %s155
          %161 = dma.hbm_to_vmem [thread:$0]  %s154, 256, %s156, %s142, 128, 128, 8
        $region20: #{tpu_custom_call.1} parent=15 // pred_fallthru
          _
        // Predicated region
        $region21: #{tpu_custom_call.1} parent=15 // pred_check
          %p162 = pneg %p87
        $region22: #{tpu_custom_call.1} parent=15 // pred_check_branch
          %164 = sbr.rel (%p162) target = $region24
        $region23: #{tpu_custom_call.1} parent=15 // pred_region
          %s165 = sand.u32 %s77, 1
          %s166 = scalar_lea.sflag [#allocation6], %s165
          %s167 = sand.u32 %s77, 1
          %s168 = smul.addr %s167, 16
          %s169 = scalar_lea.vmem [#allocation5], %s168
          %s170 = sadd.s32 %s24, %s25
          %p171 = scmp.lt.s32.totalorder %s170, 0
          %s172 = scalar_select %p171, %s170, 0
          %s173 = smul.u32 2, %s172
          %s175 = ssub.s32 256, 256
          %176 = vsyncadd %s166, %s175
          %s177 = smul.addr %s173, 128
          %s178 = scalar_lea.hbm %s1, %s177
          %s179 = sshll.u32 %s169, 4
          %s180 = int_to_ptr.vmem [resolvable:$true] %s179
          %185 = dma.hbm_to_vmem [thread:$0]  %s178, 256, %s180, %s166, 128, 128, 8
        $region24: #{tpu_custom_call.1} parent=15 // pred_fallthru
          _
      $region16: #{tpu_custom_call.1} parent=5 // pred_fallthru
        _
      %p186 = scmp.le.s32.totalorder 1, %s17
      %p187 = scmp.lt.s32.totalorder %s17, 3
      %p188 = pnand %p186, %p187
      %p189 = pneg %p188
      // Predicated region
      $region25: #{tpu_custom_call.1} parent=5 // pred_check
        _
      $region26: #{tpu_custom_call.1} parent=5 // pred_check_branch
        %191 = sbr.rel (%p188) target = $region28
      $region27: #{tpu_custom_call.1} parent=5 // pred_region
        %s192 = ssub.s32 %s17, 1
        %s193 = sand.u32 %s48, 1
        %s194 = scalar_lea.sflag [#allocation3], %s193
        %s195 = sand.u32 %s48, 1
        %s196 = smul.addr %s195, 16
        %s197 = scalar_lea.vmem [#allocation2], %s196
        // Predicated region
        $region29: #{tpu_custom_call.1} parent=27 // pred_check
          %p198 = pneg %p61
        $region30: #{tpu_custom_call.1} parent=27 // pred_check_branch
          %200 = sbr.rel (%p198) target = $region32
        $region31: #{tpu_custom_call.1} parent=27 // pred_region
          %201 = dma.done %s194, 256
        $region32: #{tpu_custom_call.1} parent=27 // pred_fallthru
          _
        %s202 = sand.u32 %s80, 1
        %s203 = scalar_lea.sflag [#allocation6], %s202
        %s204 = sand.u32 %s80, 1
        %s205 = smul.addr %s204, 16
        %s206 = scalar_lea.vmem [#allocation5], %s205
        // Predicated region
        $region33: #{tpu_custom_call.1} parent=27 // pred_check
          %p207 = pneg %p93
        $region34: #{tpu_custom_call.1} parent=27 // pred_check_branch
          %209 = sbr.rel (%p207) target = $region36
        $region35: #{tpu_custom_call.1} parent=27 // pred_region
          %210 = dma.done %s203, 256
        $region36: #{tpu_custom_call.1} parent=27 // pred_fallthru
          _
        %s211 = sand.u32 %s48, 1
        %s212 = scalar_lea.sflag [#allocation3], %s211
        %s213 = sand.u32 %s48, 1
        %s214 = smul.addr %s213, 16
        %s215 = scalar_lea.vmem [#allocation2], %s214
        %p216 = pneg %p61
        %p217 = pneg %p58
        %s218 = sand.u32 %s80, 1
        %s219 = scalar_lea.sflag [#allocation6], %s218
        %s220 = sand.u32 %s80, 1
        %s221 = smul.addr %s220, 16
        %s222 = scalar_lea.vmem [#allocation5], %s221
        %p223 = pneg %p93
        %p224 = pneg %p90
        %p225 = pneg %p119
        %p226 = pneg %p116
        %s227 = sand.u32 %s106, 1
        %s228 = scalar_lea.sflag [#allocation4], %s227
        %s229 = sand.u32 %s106, 1
        %s230 = smul.addr %s229, 8
        %s231 = scalar_lea.vmem [#allocation7], %s230
        %s232 = sadd.s32 %s26, %s27
        %p233 = scmp.lt.s32.totalorder %s232, 0
        %s234 = scalar_select %p233, %s232, 0
        %s235 = smul.u32 2, %s234
        %s236 = sadd.s32 %s26, %s27
        %p237 = scmp.lt.s32.totalorder %s236, 0
        %s238 = scalar_select %p237, %s236, 0
        %s239 = smul.u32 2, %s238
        %p240 = scmp.eq.s32.totalorder %s27, 0
        // Predicated region
        $region37: #{tpu_custom_call.1} parent=27 // pred_check
          %p241 = pneg %p240
        $region38: #{tpu_custom_call.1} parent=27 // pred_check_branch
          %243 = sbr.rel (%p241) target = $region40
        $region39: #{tpu_custom_call.1} parent=27 // pred_region
          %244 = vst [vmem:[%s231] sm:$0xff] 0.0
        $region40: #{tpu_custom_call.1} parent=27 // pred_fallthru
          _
        %v245 = vld [vmem:[%s197] sm:$0xff]
        %v246 = vld [vmem:[%s197 + $0x8] sm:$0xff]
        %v247 = vld [vmem:[%s206] sm:$0xff]
        %v248 = vld [vmem:[%s206 + $0x8] sm:$0xff]
        %s249 = sadd.s32 %s26, %s27
        %s250 = smul.u32 %s249, 16
        %v251 = vlaneseq
        %v252 = vshrl.u32 %v251, 7
        %v253 = vadd.s32 %v252, 8
        %v254 = vstv %s250
        %v255 = vadd.s32 %v254, %v252
        %v256 = vadd.s32 %v254, %v253
        %vm257 = vcmp.lt.s32.totalorder %v255, 16
        %vm258 = vcmp.lt.s32.totalorder %v256, 16
        %v259 = vsel %vm257, 1, 0
        %v260 = vsel %vm258, 1, 0
        %vm261 = vcmp.eq.s32.totalorder %v259, 1
        %vm262 = vcmp.eq.s32.totalorder %v260, 1
        %v263 = vsel %vm261, %v245, 0.0
        %v264 = vsel %vm262, %v246, 0.0
        %v265 = vsel %vm261, %v247, 0.0
        %v266 = vsel %vm262, %v248, 0.0
        %267 = vmax.xlane.f32.xlu0 %v263
        %v268 = vpop.xlane.xlu0 %267
        %269 = vmax.xlane.f32.xlu0 %v264
        %v270 = vpop.xlane.xlu0 %269
        %v271 = vsub.f32 %v263, %v268
        %v272 = vsub.f32 %v264, %v270
        %v273 = vmul.f32 %v271, 1.442695
        %v274 = vpow.pop %v273
        %v275 = vmul.f32 %v272, 1.442695
        %v276 = vpow.pop %v275
        %277 = vadd.xlane.f32.xlu0 %v274
        %v278 = vpop.xlane.xlu0 %277
        %279 = vadd.xlane.f32.xlu0 %v276
        %v280 = vpop.xlane.xlu0 %279
        %v281 = vrcp.pop %v278
        %v282 = vrcp.pop %v280
        %v283 = vmul.f32 %v274, %v281
        %v284 = vmul.f32 %v276, %v282
        %285 = vmax.xlane.f32.xlu0 %v265
        %v286 = vpop.xlane.xlu0 %285
        %287 = vmax.xlane.f32.xlu0 %v266
        %v288 = vpop.xlane.xlu0 %287
        %v289 = vsub.f32 %v265, %v286
        %v290 = vsub.f32 %v266, %v288
        %v291 = vmul.f32 %v289, 1.442695
        %v292 = vpow.pop %v291
        %v293 = vmul.f32 %v290, 1.442695
        %v294 = vpow.pop %v293
        %295 = vadd.xlane.f32.xlu0 %v292
        %v296 = vpop.xlane.xlu0 %295
        %297 = vadd.xlane.f32.xlu0 %v294
        %v298 = vpop.xlane.xlu0 %297
        %v299 = vrcp.pop %v296
        %v300 = vrcp.pop %v298
        %v301 = vmul.f32 %v292, %v299
        %v302 = vmul.f32 %v294, %v300
        %v303 = vadd.f32 %v283, %v301
        %v304 = vadd.f32 %v284, %v302
        %v305 = vmul.f32 %v303, 0.5
        %v306 = vmul.f32 %v304, 0.5
        %v307 = vmul.f32 %v283, 1.442695
        %v308 = vpow.pop %v307
        %v309 = vmul.f32 %v284, 1.442695
        %v310 = vpow.pop %v309
        %311 = vadd.xlane.f32.xlu0 %v308
        %v312 = vpop.xlane.xlu0 %311
        %313 = vadd.xlane.f32.xlu0 %v310
        %v314 = vpop.xlane.xlu0 %313
        %v315 = vlog2.pop %v312
        %v316 = vmul.f32 %v315, 0.6931472
        %v317 = vlog2.pop %v314
        %v318 = vmul.f32 %v317, 0.6931472
        %v319 = vmul.f32 %v301, 1.442695
        %v320 = vpow.pop %v319
        %v321 = vmul.f32 %v302, 1.442695
        %v322 = vpow.pop %v321
        %323 = vadd.xlane.f32.xlu0 %v320
        %v324 = vpop.xlane.xlu0 %323
        %325 = vadd.xlane.f32.xlu0 %v322
        %v326 = vpop.xlane.xlu0 %325
        %v327 = vlog2.pop %v324
        %v328 = vmul.f32 %v327, 0.6931472
        %v329 = vlog2.pop %v326
        %v330 = vmul.f32 %v329, 0.6931472
        %v331 = vadd.f32 %v316, %v328
        %v332 = vadd.f32 %v318, %v330
        %vm333 = vcmp.gt.f32.partialorder %v305, 0.0
        %vm334 = vcmp.gt.f32.partialorder %v306, 0.0
        %v335 = vsel %vm333, %v305, 1.0
        %v336 = vsel %vm334, %v306, 1.0
        %v337 = vlog2.pop %v335
        %v338 = vmul.f32 %v337, 0.6931472
        %v339 = vlog2.pop %v336
        %v340 = vmul.f32 %v339, 0.6931472
        %v341 = vmul.f32 %v305, %v338
        %v342 = vmul.f32 %v306, %v340
        %v343 = vsel %vm333, %v341, 0.0
        %v344 = vsel %vm334, %v342, 0.0
        %v345 = vmul.f32 %v343, 2.0
        %v346 = vmul.f32 %v344, 2.0
        %v347 = vmul.f32 %v305, %v305
        %v348 = vmul.f32 %v306, %v306
        %v349 = vmul.f32 %v347, 2.0
        %v350 = vmul.f32 %v348, 2.0
        %v351 = vsub.f32 %v345, %v349
        %v352 = vsub.f32 %v346, %v350
        %v353 = vmul.f32 %v305, %v331
        %v354 = vmul.f32 %v306, %v332
        %v355 = vadd.f32 %v351, %v353
        %v356 = vadd.f32 %v352, %v354
        %v357 = vsel %vm261, %v355, 0.0
        %v358 = vsel %vm262, %v356, 0.0
        %v359 = vld [vmem:[%s231] sm:$0xff]
        %v360 = vadd.f32 %v357, %v358
        %v361 = vadd.f32 %v359, %v360
        %362 = vst [vmem:[%s231] sm:$0xff] %v361
        %s363 = sand.u32 %s106, 1
        %s364 = scalar_lea.sflag [#allocation4], %s363
        %s365 = sand.u32 %s106, 1
        %s366 = smul.addr %s365, 8
        %s367 = scalar_lea.vmem [#allocation7], %s366
        // Predicated region
        $region41: #{tpu_custom_call.1} parent=27 // pred_check
          %p368 = pneg %p116
        $region42: #{tpu_custom_call.1} parent=27 // pred_check_branch
          %370 = sbr.rel (%p368) target = $region44
        $region43: #{tpu_custom_call.1} parent=27 // pred_region
          %s372 = ssub.s32 128, 128
          %373 = vsyncadd %s364, %s372
          %s374 = smul.addr %s26, 128
          %s375 = scalar_lea.hbm %s2, %s374
          %s377 = sshll.u32 %s367, 4
          %s378 = int_to_ptr.vmem [resolvable:$true] %s377
          %380 = dma.vmem_to_hbm [thread:$0]  %s378, 128, %s375, %s364
        $region44: #{tpu_custom_call.1} parent=27 // pred_fallthru
          _
      $region28: #{tpu_custom_call.1} parent=5 // pred_fallthru
        _
      %p381 = scmp.le.s32.totalorder 2, %s17
      // Predicated region
      $region45: #{tpu_custom_call.1} parent=5 // pred_check
        %p382 = pneg %p381
      $region46: #{tpu_custom_call.1} parent=5 // pred_check_branch
        %384 = sbr.rel (%p382) target = $region48
      $region47: #{tpu_custom_call.1} parent=5 // pred_region
        %s385 = ssub.s32 %s17, 2
        // Predicated region
        $region49: #{tpu_custom_call.1} parent=47 // pred_check
          %p386 = pneg %p122
        $region50: #{tpu_custom_call.1} parent=47 // pred_check_branch
          %388 = sbr.rel (%p386) target = $region52
        $region51: #{tpu_custom_call.1} parent=47 // pred_region
          %s389 = sand.u32 %s107, 1
          %s390 = scalar_lea.sflag [#allocation4], %s389
          %s391 = sand.u32 %s107, 1
          %s392 = smul.addr %s391, 8
          %s393 = scalar_lea.vmem [#allocation7], %s392
          %394 = dma.done %s390, 128
        $region52: #{tpu_custom_call.1} parent=47 // pred_fallthru
          _
      $region48: #{tpu_custom_call.1} parent=5 // pred_fallthru
        _
    $region6: #{tpu_custom_call.1} parent=1 // loop_footer
      %s21 = sadd.s32 1, %s17
    $region7: #{tpu_custom_call.1} parent=1 // loop_footer_branch
      %16 = sbr.rel target = $region3
    $region8: #{tpu_custom_call.1} parent=1 // loop_exit
      _
    %395 = vsyncpa [#allocation3], 1
    %s396 = scalar_lea.sflag [#allocation3], 1
    %397 = vsyncpa %s396, 1
    %398 = vsyncpa [#allocation6], 1
    %s399 = scalar_lea.sflag [#allocation6], 1
    %400 = vsyncpa %s399, 1
    %401 = vsyncpa [#allocation4], 1
    %s402 = scalar_lea.sflag [#allocation4], 1
    %403 = vsyncpa %s402, 1

</llo_original>
